<compile_context>
chip_gen: v7x
topology: tpu7x:2x2x1
jax: 0.10.0
libtpu: 0.0.40
codegen_flags: <defaults>
</compile_context>

<pallas_src>
import functools

import jax
import jax.numpy as jnp
import numpy as np
from jax.experimental import pallas as pl
from jax.experimental.pallas import tpu as pltpu

W_GAUSS = 0.5  # matches get_pre_cal_pa('gaussian', ...) default w=0.5

_MAX_SLAB_BYTES = 4 * 1024 * 1024      # per-row-tile slab budget
_TARGET_BLOCK_BYTES = 8 * 1024 * 1024  # target HBM writeback block
_VMEM_LIMIT_BYTES = 32 * 1024 * 1024   # safe on v5e/v6e/v7x


def _round_down_mult(n, m):
    return max(m, (n // m) * m)


def _round_up_mult(n, m):
    return ((n + m - 1) // m) * m


def _pick_row_tile(L, out_bytes, *, max_slab_bytes=_MAX_SLAB_BYTES, split_rows=True):
    """Row tile (sublane axis). Lane axis stays at full width L so stores are unmasked."""
    rt = L
    if L * L * out_bytes > max_slab_bytes:
        max_rows = max(8, max_slab_bytes // (out_bytes * L))
        rt = None
        for cand in (2048, 1024, 512, 256, 128, 64, 32, 16, 8):
            if cand <= max_rows and L % cand == 0:
                rt = cand
                break
        if rt is None:
            # Ragged final tile (Pallas masks it); keep a multiple of 8 so the
            # (8, 128) sublane constraint on the output block holds.
            rt = int(min(_round_down_mult(int(max_rows), 8), L))
    if split_rows and rt == L and L >= 16:
        # v7x has 2 TensorCores: make sure the 'parallel' row axis has >= 2
        # blocks so both cores get writeback work (near no-op on v5e/v6e).
        rt_half = _round_up_mult(pl.cdiv(L, 2), 8)
        if rt_half < L:
            rt = min(rt, rt_half)
    return rt


def _pick_batch_tile(B, row_tile, L, out_bytes, target_block_bytes=_TARGET_BLOCK_BYTES):
    """Largest divisor of B such that the (TB, row_tile, L) block stays <= target."""
    per_batch = row_tile * L * out_bytes
    cap = int(max(1, min(B, target_block_bytes // max(1, per_batch))))
    for tb in range(cap, 0, -1):
        if B % tb == 0:
            return tb
    return 1


def _pos_att_kernel(x_hbm_ref, o_ref, slab_ref, *, row_tile, w_abs):
    # x_hbm_ref: raw HBM ref (memory_space=pl.ANY). Never read -> no DMA issued.
    del x_hbm_ref
    r = pl.program_id(0)          # row-tile index   ('parallel')
    b = pl.program_id(1)          # batch-tile index (innermost, 'arbitrary')
    L = o_ref.shape[2]

    # Compute this row-slab of the gaussian attention matrix once per row tile
    # (at b == 0); steps b = 1..nB-1 reuse the cached slab -> pure writeback.
    @pl.when(b == 0)
    def _():
        ii = jax.lax.broadcasted_iota(jnp.int32, (row_tile, L), 0) + r * row_tile
        ii = jnp.minimum(ii, L - 1)     # clamp ragged (masked) rows -> stay finite
        jj = jax.lax.broadcasted_iota(jnp.int32, (row_tile, L), 1)
        d = (jj - ii).astype(jnp.float32)
        logits = -(w_abs * d) * d       # == -|w*(j-i)^2| since w_abs >= 0
        e = jnp.exp(logits)             # EUP
        denom = jnp.sum(e, axis=1, keepdims=True)  # XLU row reduce
        slab_ref[...] = (e * pl.reciprocal(denom, approx=False)).astype(slab_ref.dtype)

    # Per-step: replicate cached slab across the TB batches of this block.
    o_ref[...] = jnp.broadcast_to(slab_ref[...][None, :, :], o_ref.shape)


def positional_att_cached(x, *, w=W_GAUSS, out_dtype=jnp.float32,
                          row_tile=None, batch_tile=None):
    """x: [B, L, D] -> [B, L, L] gaussian positional attention (same for all b)."""
    B, L, _ = x.shape  # x's values / feature dim are never used.
    out_bytes = jnp.dtype(out_dtype).itemsize
    if row_tile is None:
        row_tile = _pick_row_tile(L, out_bytes)
    n_row_tiles = pl.cdiv(L, row_tile)
    if batch_tile is None:
        batch_tile = _pick_batch_tile(B, row_tile, L, out_bytes)
    assert B % batch_tile == 0, "batch_tile must divide B"
    n_batch_tiles = B // batch_tile

    w_abs = abs(float(w))  # reference applies abs(); fold it in at trace time

    kernel = functools.partial(_pos_att_kernel, row_tile=row_tile, w_abs=w_abs)
    return pl.pallas_call(
        kernel,
        out_shape=jax.ShapeDtypeStruct((B, L, L), out_dtype),
        grid_spec=pltpu.PrefetchScalarGridSpec(
            num_scalar_prefetch=0,
            grid=(n_row_tiles, n_batch_tiles),      # batch innermost -> slab reuse
            in_specs=[pl.BlockSpec(memory_space=pl.ANY)],   # no DMA for unused x
            out_specs=pl.BlockSpec((batch_tile, row_tile, L),
                                   lambda r, b: (b, r, 0)),
            scratch_shapes=[pltpu.VMEM((row_tile, L), out_dtype)],
        ),
        compiler_params=pltpu.CompilerParams(
            dimension_semantics=("parallel", "arbitrary"),
            vmem_limit_bytes=_VMEM_LIMIT_BYTES,
        ),
    )(x)


def _reference_numpy(B, L, w=W_GAUSS):
    # Vectorized transcription of cal_guassian_att for one length, batch-repeated.
    if L > 1:
        idx = np.arange(L, dtype=np.float64)
        d = idx[None, :] - idx[:, None]            # d[i, j] = j - i
        logits = -np.abs(w * d * d)
        e = np.exp(logits)
        attn = e / e.sum(axis=1, keepdims=True)
    else:
        attn = np.array([[1.0]])
    return np.broadcast_to(attn[None], (B, L, L)).astype(np.float32)


if __name__ == "__main__":
    key = jax.random.PRNGKey(0)

    # Case 1: small shape matching the module's usage (B, L, D) = (2, 8, 32).
    B, L, D = 2, 8, 32
    x = jax.random.normal(key, (B, L, D), dtype=jnp.float32)
    out = jax.block_until_ready(positional_att_cached(x))
    assert out.shape == (B, L, L), out.shape
    np.testing.assert_allclose(np.asarray(out), _reference_numpy(B, L),
                               rtol=1e-5, atol=1e-6)

    # Case 2: multi row-tile + multi batch-tile path (slab reuse across b > 0).
    B2, L2, D2 = 4, 16, 32
    x2 = jax.random.normal(key, (B2, L2, D2), dtype=jnp.float32)
    out2 = jax.block_until_ready(
        positional_att_cached(x2, row_tile=8, batch_tile=2))
    assert out2.shape == (B2, L2, L2), out2.shape
    np.testing.assert_allclose(np.asarray(out2), _reference_numpy(B2, L2),
                               rtol=1e-5, atol=1e-6)

    # Case 3: auto tiling with a ragged final row tile (L=40 -> row_tile=24,
    # megacore split engaged, last tile masked + ii clamped).
    B3, L3, D3 = 3, 40, 32
    x3 = jax.random.normal(key, (B3, L3, D3), dtype=jnp.float32)
    out3 = jax.block_until_ready(positional_att_cached(x3))
    assert out3.shape == (B3, L3, L3), out3.shape
    np.testing.assert_allclose(np.asarray(out3), _reference_numpy(B3, L3),
                               rtol=1e-5, atol=1e-6)

    print("KERNEL_OK")
</pallas_src>

<mosaic_0001>
module attributes {stable_mosaic.version = 11 : i64} {
  func.func @_pos_att_kernel(%arg0: i32, %arg1: i32, %arg2: memref<2x8x32xf32, #tpu.memory_space<any>>, %arg3: memref<2x8x8xf32, #tpu.memory_space<vmem>>, %arg4: memref<8x8xf32, #tpu.memory_space<vmem>>) attributes {dimension_semantics = [#tpu.dimension_semantics<parallel>, #tpu.dimension_semantics<arbitrary>], iteration_bounds = array<i64: 1, 1>, scalar_prefetch = 0 : i64, scratch_operands = 1 : i64, tpu.core_type = #tpu.core_type<tc>, window_params = [{}, {transform_indices = @transform_1, window_bounds = array<i64: 2, 8, 8>}]} {
    %c0_i32 = arith.constant 0 : i32
    %0 = arith.cmpi eq, %arg1, %c0_i32 : i32
    %1 = arith.extui %0 : i1 to i32
    %c0_i32_0 = arith.constant 0 : i32
    %2 = arith.cmpi ne, %1, %c0_i32_0 : i32
    scf.if %2 {
      %8 = tpu.iota {dimensions = array<i32: 0>} : vector<8x8xi32>
      %c8_i32 = arith.constant 8 : i32
      %9 = arith.muli %arg0, %c8_i32 : i32
      %10 = vector.broadcast %9 : i32 to vector<8x8xi32>
      %11 = arith.addi %8, %10 : vector<8x8xi32>
      %c7_i32 = arith.constant 7 : i32
      %12 = vector.broadcast %c7_i32 : i32 to vector<8x8xi32>
      %13 = arith.minsi %11, %12 : vector<8x8xi32>
      %14 = tpu.iota {dimensions = array<i32: 1>} : vector<8x8xi32>
      %15 = arith.subi %14, %13 : vector<8x8xi32>
      %16 = arith.sitofp %15 : vector<8x8xi32> to vector<8x8xf32>
      %cst = arith.constant 5.000000e-01 : f32
      %17 = vector.broadcast %cst : f32 to vector<8x8xf32>
      %18 = arith.mulf %17, %16 : vector<8x8xf32>
      %cst_5 = arith.constant 0.000000e+00 : f32
      %19 = vector.broadcast %cst_5 : f32 to vector<8x8xf32>
      %20 = arith.subf %19, %18 : vector<8x8xf32>
      %21 = arith.mulf %20, %16 : vector<8x8xf32>
      %22 = math.exp %21 : vector<8x8xf32>
      %cst_6 = arith.constant dense<0.000000e+00> : vector<8xf32>
      %23 = vector.multi_reduction <add>, %22, %cst_6 [1] : vector<8x8xf32> to vector<8xf32>
      %24 = vector.shape_cast %23 : vector<8xf32> to vector<8x1xf32>
      %25 = tpu.reciprocal %24 : vector<8x1xf32> -> vector<8x1xf32>
      %26 = vector.broadcast %25 : vector<8x1xf32> to vector<8x8xf32>
      %27 = arith.mulf %22, %26 : vector<8x8xf32>
      %c0_7 = arith.constant 0 : index
      %c0_8 = arith.constant 0 : index
      %28 = vector.load %arg4[%c0_7, %c0_8] : memref<8x8xf32, #tpu.memory_space<vmem>>, vector<8x8xf32>
      tpu.vector_store %arg4[%c0_7, %c0_8], %27 {strides = array<i32>} : memref<8x8xf32, #tpu.memory_space<vmem>>, vector<8x8xf32>,
    } else {
    }
    %c0 = arith.constant 0 : index
    %c0_1 = arith.constant 0 : index
    %3 = vector.load %arg4[%c0, %c0_1] : memref<8x8xf32, #tpu.memory_space<vmem>>, vector<8x8xf32>
    %4 = vector.shape_cast %3 : vector<8x8xf32> to vector<1x8x8xf32>
    %5 = vector.shape_cast %4 : vector<1x8x8xf32> to vector<1x8x8xf32>
    %6 = vector.broadcast %5 : vector<1x8x8xf32> to vector<2x8x8xf32>
    %c0_2 = arith.constant 0 : index
    %c0_3 = arith.constant 0 : index
    %c0_4 = arith.constant 0 : index
    %7 = vector.load %arg3[%c0_2, %c0_3, %c0_4] : memref<2x8x8xf32, #tpu.memory_space<vmem>>, vector<2x8x8xf32>
    tpu.vector_store %arg3[%c0_2, %c0_3, %c0_4], %6 {strides = array<i32>} : memref<2x8x8xf32, #tpu.memory_space<vmem>>, vector<2x8x8xf32>,
    return
  }
  func.func @transform_1(%arg0: i32, %arg1: i32) -> (i32, i32, i32) {
    %c0_i32 = arith.constant 0 : i32
    %c0_i32_0 = arith.constant 0 : i32
    return %arg1, %arg0, %c0_i32 : i32, i32, i32
  }
}

</mosaic_0001>

<llo_original>
// kernel: tpu_custom_call.1
$region0: #{tpu_custom_call.1}
  #allocation0 [shape = 'u32[]', space=smem, size = 0x4, offset = 0x4, fixed_abs, tag = 'smem constant byte address 0x4 - core index']
  #allocation1 [shape = 'u32[144,128]{1,0:T(1,128)}', space=vmem, size = 0x12000, scoped, tag = 'internal scratch']
  #allocation2 [shape = 'f32[8,8]{1,0:T(8,128)}', space=vmem, size = 0x1000, scoped, tag = 'scratch operand']
  %s0 = inlined_call_operand.hbm [shape: f32[2,8,32], index: 0, kind: input, shape index: {}]
  %s1 = inlined_call_operand.hbm [shape: f32[2,8,8], index: 1, kind: output, shape index: {}]
  %s2 = sld [smem:[#allocation0]]
  $region14: #{tpu_custom_call.1} parent=0
    _
  %s4 = ssub.s32 1, %s2
  %s5 = scalar_select 0, %s4, %s2
  $region1: #{tpu_custom_call.1} parent=0
    #allocation3 [shape = 'u8[8192]{0}', space=vmem, size = 0x2000, scoped, tag = 'output window, operand 0, single buffered']
    #allocation4 [shape = 's32[1]{0}', space=sflag, size = 0x4, scoped, tag = 'scoped memory for tpu_custom_call.1']
    %6 = vsyncpa [#allocation4], 0
    %p7 = scmp.eq.s32.totalorder 0, 0
    // Predicated region
    $region2: #{tpu_custom_call.1} parent=1 // pred_check
      %p8 = pneg %p7
    $region3: #{tpu_custom_call.1} parent=1 // pred_check_branch
      %10 = sbr.rel (%p8) target = $region5
    $region4: #{tpu_custom_call.1} parent=1 // pred_region
      %v11 = vlaneseq
      %v12 = vshrl.u32 %v11, 7
      %s13 = smul.u32 0, 8
      %v14 = vstv %s13
      %v15 = vadd.s32 %v12, %v14
      %vm16 = vcmp.lt.s32.totalorder %v15, 7
      %v17 = vsel %vm16, %v15, 7
      %v18 = vlaneseq
      %v19 = vand.u32 %v18, 127
      %v20 = vsub.s32 %v19, %v17
      %v21 = vcvt.s32.f32 %v20
      %v22 = vmul.f32 %v21, 0.5
      %v23 = vsub.f32 0.0, %v22
      %v24 = vmul.f32 %v23, %v21
      %v25 = vmul.f32 %v24, 1.442695
      %v26 = vpow.pop %v25
      %vm27 = vcmask 64512
      %v28 = vsel %vm27, %v26, 0.0
      %29 = vadd.xlane.f32.xlu0 %v28
      %v30 = vpop.xlane.xlu0 %29
      %v31 = vrcp.pop %v30
      %v32 = vmul.f32 %v26, %v31
      %33 = vst.msk [vmem:[#allocation2] sm:$0xff] %vm27, %v32
    $region5: #{tpu_custom_call.1} parent=1 // pred_fallthru
      _
    %v34 = vld [vmem:[#allocation2] sm:$0xff]
    %vm35 = vcmask 64512
    %36 = vst.msk [vmem:[#allocation3] sm:$0xff] %vm35, %v34
    %37 = vst.msk [vmem:[#allocation3 + $0x8] sm:$0xff] %vm35, %v34
    // Predicated region
    $region6: #{tpu_custom_call.1} parent=1 // pred_check
      _
    $region7: #{tpu_custom_call.1} parent=1 // pred_check_branch
      %39 = sbr.rel (0) target = $region9
    $region8: #{tpu_custom_call.1} parent=1 // pred_region
      %s41 = ssub.s32 256, 256
      %42 = vsyncadd [#allocation4], %s41
      %s43 = sshll.u32 [#allocation3], 4
      %s44 = int_to_ptr.vmem [resolvable:$true] %s43
      %49 = dma.vmem_to_hbm [thread:$0]  %s44, 256, %s1, [#allocation4], 128, 128, 8
    $region9: #{tpu_custom_call.1} parent=1 // pred_fallthru
      _
    // Predicated region
    $region10: #{tpu_custom_call.1} parent=1 // pred_check
      _
    $region11: #{tpu_custom_call.1} parent=1 // pred_check_branch
      %51 = sbr.rel (0) target = $region13
    $region12: #{tpu_custom_call.1} parent=1 // pred_region
      %52 = dma.done [#allocation4], 256
    $region13: #{tpu_custom_call.1} parent=1 // pred_fallthru
      _
    %53 = vsyncpa [#allocation4], 1

</llo_original>
